<compile_context>
chip_gen: v5e
topology: v5e:2x2
jax: 0.10.0
libtpu: 0.0.40
codegen_flags: <defaults>
</compile_context>

<pallas_src>
import functools
import math

import jax
import jax.numpy as jnp
from jax.experimental import pallas as pl
from jax.experimental.pallas import tpu as pltpu


_LANE = 128
_MAX_LANE_TILE = 2048            # multiple of 128; 8 KiB/row at f32
_MAX_REPACK_LANES = 16384        # cap on the lane-repacked row width
_SMALL_FALLBACK_BYTES = 256 * 1024

_DEFAULT_TILE_BUDGET = 2 * 1024 * 1024
_DEFAULT_VMEM_LIMIT = 32 * 1024 * 1024


@functools.lru_cache(maxsize=1)
def _tpu_config():
    """Returns (tile_budget_bytes, vmem_limit_bytes, tensorcores_per_chip)."""
    tile_budget = _DEFAULT_TILE_BUDGET
    vmem_limit = _DEFAULT_VMEM_LIMIT
    n_tc = 1
    kind = ""
    try:
        kind = jax.devices()[0].device_kind.lower()
    except Exception:
        pass
    if "v7" in kind:
        # 2 in-buffers + 2 out-buffers x 8 MiB = 32 MiB, comfortably < 64 MiB VMEM.
        tile_budget = 8 * 1024 * 1024
        vmem_limit = 40 * 1024 * 1024
        n_tc = 2
    elif "v6" in kind:
        tile_budget = 4 * 1024 * 1024    # 16 MiB of buffers, well under the 32 MiB limit
    elif "v4" in kind:
        n_tc = 2                         # megacore
    # v5e / unknown: keep 2 MiB tiles; the explicit 32 MiB vmem limit matters
    # on v5e because its scoped default is only 16 MiB.
    return tile_budget, vmem_limit, n_tc


def _sublane_quantum(dtype):
    """Sublane packing for block rows: 8 for f32, 16 for bf16, 32 for int8/fp8."""
    itemsize = jnp.dtype(dtype).itemsize
    return max(8, 32 // max(1, itemsize))


def _lane_repack_width(period, total):
    """Smallest lane width L that is a multiple of both `period` (the mask
    repetition period in the flat element order) and 128, provided the flat
    array of `total` elements divides evenly into rows of L.  Returns None if
    no clean repack exists (we never pad: padding would add a full extra
    read+write of a bandwidth-bound tensor)."""
    lane_mult = period * _LANE // math.gcd(period, _LANE)
    if lane_mult > _MAX_REPACK_LANES:
        return None
    if total % lane_mult != 0:
        return None
    return lane_mult


def _pick_tiles(rows, lanes, dtype, tile_budget, n_tc):
    """Pick (tm, tl) block shape: lane-dense, VMEM-budgeted, megacore-aware."""
    itemsize = jnp.dtype(dtype).itemsize
    rq = _sublane_quantum(dtype)

    # Lane tile: full dim if small, else a large multiple of 128.
    tl = lanes if lanes <= _MAX_LANE_TILE else _MAX_LANE_TILE

    # Row tile: as many rows as fit the per-tile budget, rounded to sublane packing.
    max_rows = max(1, tile_budget // max(1, tl * itemsize))
    if rows <= max_rows:
        tm = rows
    else:
        tm = max(rq, (max_rows // rq) * rq)
        if tm >= rows:
            tm = rows

    # If everything landed in one block, split a "parallel" axis so the grid
    # can shard across both TensorCores -- but only on multi-TC chips (on
    # single-TC v5e/v6e the extra grid step is pure overhead).  Splits stay
    # legal: row blocks multiple of the sublane quantum, lane blocks multiple
    # of 128.
    if n_tc >= 2 and pl.cdiv(rows, tm) * pl.cdiv(lanes, tl) == 1:
        if rows >= 2 * rq:
            half = (rows + 1) // 2
            tm = ((half + rq - 1) // rq) * rq
        elif lanes >= 2 * _LANE:
            half = (lanes + 1) // 2
            tl = ((half + _LANE - 1) // _LANE) * _LANE
    return tm, tl


def _mask_mul_kernel(x_ref, m_ref, o_ref):
    # x_ref: (tm, tl) activation tile.
    # m_ref: (tm, 1) per-row mask column, or (1, tl) per-lane mask row.
    # Single VPU multiply with an in-register broadcast of the mask.
    o_ref[...] = x_ref[...] * m_ref[...]


@functools.partial(jax.jit, static_argnames=("tm", "tl", "mask_axis"))
def _masked_mul_2d(x2d, mask2d, *, tm, tl, mask_axis):
    """Apply a broadcasting mask to a 2D slab.

    mask_axis=0: mask2d has shape (rows, 1)  -> per-row mask (4D NCHW path).
    mask_axis=1: mask2d has shape (1, lanes) -> per-lane mask (lane-dense path).
    """
    rows, lanes = x2d.shape
    _, vmem_limit, _ = _tpu_config()
    grid = (pl.cdiv(rows, tm), pl.cdiv(lanes, tl))
    if mask_axis == 0:
        m_block = (tm, 1)
        m_map = lambda i, j: (i, 0)
    else:
        m_block = (1, tl)
        m_map = lambda i, j: (0, j)
    itemsize = jnp.dtype(x2d.dtype).itemsize
    cost = pl.CostEstimate(
        flops=rows * lanes,
        transcendentals=0,
        bytes_accessed=(2 * rows * lanes + mask2d.size) * itemsize,
    )
    return pl.pallas_call(
        _mask_mul_kernel,
        out_shape=jax.ShapeDtypeStruct((rows, lanes), x2d.dtype),
        grid_spec=pltpu.PrefetchScalarGridSpec(
            num_scalar_prefetch=0,
            grid=grid,
            in_specs=[
                pl.BlockSpec((tm, tl), lambda i, j: (i, j)),
                pl.BlockSpec(m_block, m_map),
            ],
            out_specs=pl.BlockSpec((tm, tl), lambda i, j: (i, j)),
        ),
        compiler_params=pltpu.CompilerParams(
            dimension_semantics=("parallel", "parallel"),
            vmem_limit_bytes=vmem_limit,
        ),
        cost_estimate=cost,
    )(x2d, mask2d)


class ActMaskPallas:
    """JAX/Pallas port of taylor_pruning.mask.ActMask."""

    def __init__(self, num_channels, small_fallback_bytes=_SMALL_FALLBACK_BYTES):
        assert isinstance(num_channels, int)
        assert num_channels >= 1
        self.num_channels = num_channels
        self.small_fallback_bytes = small_fallback_bytes
        # Deterministic init, identical to nn.Parameter(torch.ones(C)).
        self.mask = jnp.ones((num_channels,), dtype=jnp.float32)
        # Cache of expanded/broadcast masks, keyed on layout; invalidated by
        # identity when self.mask is reassigned.
        self._mask_cache = {}

    def _expanded_mask(self, key, builder):
        entry = self._mask_cache.get(key)
        if entry is not None and entry[0] is self.mask:
            return entry[1]
        expanded = builder()
        self._mask_cache[key] = (self.mask, expanded)
        return expanded

    def __call__(self, x):
        c = self.num_channels
        dtype = x.dtype
        total = x.size
        nbytes = total * jnp.dtype(dtype).itemsize

        if x.ndim == 4:
            n, ch, h, w = x.shape
            assert ch == c
        else:
            # torch broadcasting: mask of shape (C,) aligns with the last dim.
            # TODO(synk): 3D NCL (Conv1d) inputs where the mask should align
            # with axis 1 are not covered by the torch source either.
            assert x.shape[-1] == c

        # Tiny activations: a fused XLA broadcast-mul is already at roofline;
        # skip the pallas_call launch + pipeline-prime cost.
        if nbytes < self.small_fallback_bytes:
            if x.ndim == 4:
                return x * self.mask.astype(dtype).reshape(1, c, 1, 1)
            return x * self.mask.astype(dtype)

        tile_budget, _, n_tc = _tpu_config()

        if x.ndim == 4:
            hw = h * w
            if hw >= _LANE and hw % _LANE == 0:
                # Lane-dense spatial dim: (N*C, H*W) slab (free row-major
                # reshape) with a tiny per-row mask column.
                rows, lanes = n * c, hw
                x2d = x.reshape(rows, lanes)
                m = self._expanded_mask(
                    ("row_col", str(dtype), n),
                    lambda: jnp.tile(self.mask.astype(dtype), (n,)).reshape(n * c, 1),
                )
                mask_axis = 0
            else:
                # Small / unaligned H*W (e.g. 7x7, 14x14): fold channels into
                # the lane axis so stores stay lane-dense.
                period = c * hw
                repack = _lane_repack_width(period, total)
                if repack is not None:
                    lanes = repack
                    rows = total // lanes
                    reps = lanes // period
                    x2d = x.reshape(rows, lanes)
                    m = self._expanded_mask(
                        ("fold_repack", str(dtype), hw, reps),
                        lambda: jnp.tile(
                            jnp.repeat(self.mask.astype(dtype), hw), (reps,)
                        ).reshape(1, period * reps),
                    )
                else:
                    rows, lanes = n, period
                    x2d = x.reshape(rows, lanes)
                    m = self._expanded_mask(
                        ("fold", str(dtype), hw),
                        lambda: jnp.repeat(self.mask.astype(dtype), hw).reshape(1, c * hw),
                    )
                mask_axis = 1
            tm, tl = _pick_tiles(rows, lanes, dtype, tile_budget, n_tc)
            y2d = _masked_mul_2d(x2d, m, tm=tm, tl=tl, mask_axis=mask_axis)
            return y2d.reshape(n, c, h, w)
        else:
            if c >= _LANE and c % _LANE == 0:
                rows, lanes = total // c, c
                x2d = x.reshape(rows, lanes)
                m = self._expanded_mask(
                    ("lane", str(dtype)),
                    lambda: self.mask.astype(dtype).reshape(1, c),
                )
            else:
                # Small C: repack the flat array into lane-dense rows of
                # L = lcm(C, 128) with a tiled (1, L) lane mask (unmasked vst
                # instead of low-occupancy masked stores).
                repack = _lane_repack_width(c, total)
                if repack is not None:
                    lanes = repack
                    rows = total // lanes
                    reps = lanes // c
                    x2d = x.reshape(rows, lanes)
                    m = self._expanded_mask(
                        ("lane_repack", str(dtype), reps),
                        lambda: jnp.tile(self.mask.astype(dtype), (reps,)).reshape(1, c * reps),
                    )
                else:
                    rows, lanes = total // c, c
                    x2d = x.reshape(rows, lanes)
                    m = self._expanded_mask(
                        ("lane", str(dtype)),
                        lambda: self.mask.astype(dtype).reshape(1, c),
                    )
            tm, tl = _pick_tiles(rows, lanes, dtype, tile_budget, n_tc)
            y2d = _masked_mul_2d(x2d, m, tm=tm, tl=tl, mask_axis=1)
            return y2d.reshape(*x.shape)


if __name__ == "__main__":
    key = jax.random.PRNGKey(0)
    k1, k2, k3, k4, k5 = jax.random.split(key, 5)

    # --- Test A: 4D NCHW, lane-dense H*W (Pallas per-row-mask path) ---
    n, c, h, w = 2, 4, 16, 16
    x = jax.random.normal(k1, (n, c, h, w), dtype=jnp.float32)
    mod_a = ActMaskPallas(num_channels=c, small_fallback_bytes=0)  # force Pallas
    mod_a.mask = jnp.array([1.0, 0.0, 1.0, 0.0], dtype=jnp.float32)
    y = jax.block_until_ready(mod_a(x))
    ref = x * mod_a.mask.reshape(1, c, 1, 1)
    assert y.shape == x.shape and y.dtype == x.dtype
    assert jnp.allclose(y, ref, atol=0, rtol=0)

    # --- Test B: 4D NCHW, small unaligned H*W (channel-fold lane path) ---
    xb = jax.random.normal(k2, (2, 4, 7, 7), dtype=jnp.float32)
    mod_b = ActMaskPallas(num_channels=4, small_fallback_bytes=0)
    mod_b.mask = jnp.array([0.0, 1.0, 1.0, 0.0], dtype=jnp.float32)
    yb = jax.block_until_ready(mod_b(xb))
    refb = xb * mod_b.mask.reshape(1, 4, 1, 1)
    assert jnp.allclose(yb, refb, atol=0, rtol=0)

    # --- Test C: generic trailing-dim path, small C (lane-repack path) ---
    c2 = 32
    x2 = jax.random.normal(k3, (8, c2), dtype=jnp.float32)
    mod_c = ActMaskPallas(num_channels=c2, small_fallback_bytes=0)
    mod_c.mask = (jnp.arange(c2) % 2).astype(jnp.float32)
    y2 = jax.block_until_ready(mod_c(x2))
    ref2 = x2 * mod_c.mask.reshape(1, c2)
    assert jnp.allclose(y2, ref2, atol=0, rtol=0)

    # --- Test D: larger 4D input above the default small-tensor threshold ---
    xd = jax.random.normal(k4, (2, 16, 64, 64), dtype=jnp.float32)  # 512 KiB
    mod_d = ActMaskPallas(num_channels=16)                          # default fallback
    mod_d.mask = (jnp.arange(16) % 3 != 0).astype(jnp.float32)
    yd = jax.block_until_ready(mod_d(xd))
    refd = xd * mod_d.mask.reshape(1, 16, 1, 1)
    assert jnp.allclose(yd, refd, atol=0, rtol=0)
    # Second call exercises the mask-expansion cache.
    yd2 = jax.block_until_ready(mod_d(xd))
    assert jnp.allclose(yd2, refd, atol=0, rtol=0)

    # --- Test E: tiny activation takes the plain-JAX fallback, same result ---
    xe = jax.random.normal(k5, (2, 4, 16, 16), dtype=jnp.float32)   # 8 KiB
    mod_e = ActMaskPallas(num_channels=4)                           # default fallback
    mod_e.mask = jnp.array([1.0, 1.0, 0.0, 1.0], dtype=jnp.float32)
    ye = jax.block_until_ready(mod_e(xe))
    refe = xe * mod_e.mask.reshape(1, 4, 1, 1)
    assert jnp.allclose(ye, refe, atol=0, rtol=0)

    print("KERNEL_OK")
</pallas_src>

<mosaic_0001>
module attributes {stable_mosaic.version = 11 : i64} {
  func.func @_mask_mul_kernel(%arg0: i32, %arg1: i32, %arg2: memref<8x256xf32, #tpu.memory_space<vmem>>, %arg3: memref<8x1xf32, #tpu.memory_space<vmem>>, %arg4: memref<8x256xf32, #tpu.memory_space<vmem>>) attributes {dimension_semantics = [#tpu.dimension_semantics<parallel>, #tpu.dimension_semantics<parallel>], iteration_bounds = array<i64: 1, 1>, scalar_prefetch = 0 : i64, scratch_operands = 0 : i64, tpu.core_type = #tpu.core_type<tc>, window_params = [{transform_indices = @transform_0, window_bounds = array<i64: 8, 256>}, {transform_indices = @transform_1, window_bounds = array<i64: 8, 1>}, {transform_indices = @transform_2, window_bounds = array<i64: 8, 256>}]} {
    %c0 = arith.constant 0 : index
    %c0_0 = arith.constant 0 : index
    %0 = vector.load %arg2[%c0, %c0_0] : memref<8x256xf32, #tpu.memory_space<vmem>>, vector<8x256xf32>
    %c0_1 = arith.constant 0 : index
    %c0_2 = arith.constant 0 : index
    %1 = vector.load %arg3[%c0_1, %c0_2] : memref<8x1xf32, #tpu.memory_space<vmem>>, vector<8x1xf32>
    %2 = vector.broadcast %1 : vector<8x1xf32> to vector<8x256xf32>
    %3 = arith.mulf %0, %2 : vector<8x256xf32>
    %c0_3 = arith.constant 0 : index
    %c0_4 = arith.constant 0 : index
    %4 = vector.load %arg4[%c0_3, %c0_4] : memref<8x256xf32, #tpu.memory_space<vmem>>, vector<8x256xf32>
    tpu.vector_store %arg4[%c0_3, %c0_4], %3 {strides = array<i32>} : memref<8x256xf32, #tpu.memory_space<vmem>>, vector<8x256xf32>,
    return
  }
  func.func @transform_0(%arg0: i32, %arg1: i32) -> (i32, i32) {
    %c0_i32 = arith.constant 0 : i32
    return %arg0, %arg1 : i32, i32
  }
  func.func @transform_1(%arg0: i32, %arg1: i32) -> (i32, i32) {
    %c0_i32 = arith.constant 0 : i32
    %c0_i32_0 = arith.constant 0 : i32
    return %arg0, %c0_i32 : i32, i32
  }
  func.func @transform_2(%arg0: i32, %arg1: i32) -> (i32, i32) {
    %c0_i32 = arith.constant 0 : i32
    return %arg0, %arg1 : i32, i32
  }
}

</mosaic_0001>

<llo_original>
// kernel: _masked_mul_2d.1
$region0: #{_masked_mul_2d.1}
  #allocation0 [shape = 'u32[]', space=smem, size = 0x4, offset = 0x4, fixed_abs, tag = 'smem constant byte address 0x4 - core index']
  #allocation1 [shape = 'u32[72,128]{1,0:T(1,128)}', space=vmem, size = 0x9000, scoped, tag = 'internal scratch']
  %s0 = inlined_call_operand.hbm [shape: f32[8,256], index: 0, kind: input, shape index: {}]
  %s1 = inlined_call_operand.vmem [shape: f32[8,1], index: 1, kind: input, shape index: {}]
  %s2 = inlined_call_operand.hbm [shape: f32[8,256], index: 2, kind: output, shape index: {}]
  %s3 = sld [smem:[#allocation0]]
  $region22: #{_masked_mul_2d.1} parent=0
    _
  %s5 = ssub.s32 1, %s3
  %s6 = scalar_select 0, %s5, %s3
  $region1: #{_masked_mul_2d.1} parent=0
    #allocation2 [shape = 'u8[8192]{0}', space=vmem, size = 0x2000, scoped, tag = 'input window, operand 0, single buffered']
    #allocation3 [shape = 's32[1]{0}', space=sflag, size = 0x4, scoped, tag = 'scoped memory for _masked_mul_2d.1']
    #allocation4 [shape = 's32[1]{0}', space=sflag, size = 0x4, scoped, tag = 'scoped memory for _masked_mul_2d.1']
    #allocation5 [shape = 'u8[8192]{0}', space=vmem, size = 0x2000, scoped, tag = 'output window, operand 0, single buffered']
    %7 = vsyncpa [#allocation3], 0
    %8 = vsyncpa [#allocation4], 0
    // Predicated region
    $region2: #{_masked_mul_2d.1} parent=1 // pred_check
      _
    $region3: #{_masked_mul_2d.1} parent=1 // pred_check_branch
      %10 = sbr.rel (0) target = $region5
    $region4: #{_masked_mul_2d.1} parent=1 // pred_region
      %12 = vsyncadd [#allocation3], 0
      %s14 = sshll.u32 %s0, 4
      %s15 = int_to_ptr.hbm [resolvable:$true] %s14
      %s16 = sshll.u32 [#allocation2], 4
      %s17 = int_to_ptr.vmem [resolvable:$true] %s16
      %19 = dma.hbm_to_vmem [thread:$0]  %s15, 256, %s17, [#allocation3]
    $region5: #{_masked_mul_2d.1} parent=1 // pred_fallthru
      _
    // Predicated region
    $region6: #{_masked_mul_2d.1} parent=1 // pred_check
      _
    $region7: #{_masked_mul_2d.1} parent=1 // pred_check_branch
      %21 = sbr.rel (0) target = $region9
    $region8: #{_masked_mul_2d.1} parent=1 // pred_region
      _
    $region9: #{_masked_mul_2d.1} parent=1 // pred_fallthru
      _
    // Predicated region
    $region10: #{_masked_mul_2d.1} parent=1 // pred_check
      _
    $region11: #{_masked_mul_2d.1} parent=1 // pred_check_branch
      %23 = sbr.rel (0) target = $region13
    $region12: #{_masked_mul_2d.1} parent=1 // pred_region
      %25 = dma.done [#allocation3], 256
    $region13: #{_masked_mul_2d.1} parent=1 // pred_fallthru
      _
    %v26 = vld [vmem:[#allocation2] sm:$0xff]
    %v27 = vld [vmem:[#allocation2 + $0x8] sm:$0xff]
    %v28 = vld [vmem:[%s1] sm:$0xff]
    %30 = vset.pattern.permute.xlu0 0
    %31 = vperm.xlu0 %30, %v28
    %v32 = vpop.permute.xlu0 %31
    %v34 = vmul.f32 %v26, %v32
    %v35 = vmul.f32 %v27, %v32
    %36 = vst [vmem:[#allocation5] sm:$0xff] %v34
    %37 = vst [vmem:[#allocation5 + $0x8] sm:$0xff] %v35
    // Predicated region
    $region14: #{_masked_mul_2d.1} parent=1 // pred_check
      _
    $region15: #{_masked_mul_2d.1} parent=1 // pred_check_branch
      %39 = sbr.rel (0) target = $region17
    $region16: #{_masked_mul_2d.1} parent=1 // pred_region
      %41 = vsyncadd [#allocation4], 0
      %s43 = sshll.u32 [#allocation5], 4
      %s44 = int_to_ptr.vmem [resolvable:$true] %s43
      %s45 = sshll.u32 %s2, 4
      %s46 = int_to_ptr.hbm [resolvable:$true] %s45
      %48 = dma.vmem_to_hbm [thread:$0]  %s44, 256, %s46, [#allocation4]
    $region17: #{_masked_mul_2d.1} parent=1 // pred_fallthru
      _
    // Predicated region
    $region18: #{_masked_mul_2d.1} parent=1 // pred_check
      _
    $region19: #{_masked_mul_2d.1} parent=1 // pred_check_branch
      %50 = sbr.rel (0) target = $region21
    $region20: #{_masked_mul_2d.1} parent=1 // pred_region
      %52 = dma.done [#allocation4], 256
    $region21: #{_masked_mul_2d.1} parent=1 // pred_fallthru
      _
    %53 = vsyncpa [#allocation3], 1
    %54 = vsyncpa [#allocation4], 1

</llo_original>
